<compile_context>
chip_gen: v7x
topology: tpu7x:2x2x1
jax: 0.10.0
libtpu: 0.0.40
codegen_flags: <defaults>
</compile_context>

<pallas_src>
import functools

import jax
import jax.numpy as jnp
from jax import lax
from jax.experimental import pallas as pl
from jax.experimental.pallas import tpu as pltpu

_LANES = 128
_SUBLANES = 8
_MAX_TILE_ROWS = 2048                 # 2048*128*4B = 1 MiB per f32 tile buffer
_VMEM_LIMIT = 32 * 1024 * 1024
_VMEM_BUDGET = 20 * 1024 * 1024       # budget for double-buffered kernel inputs


# -----------------------------------------------------------------------------
# Small helpers
# -----------------------------------------------------------------------------
def _round_up(x, m):
    return (x + m - 1) // m * m


def _detect_ncores():
    """2 TensorCores only on v7x; single-TC chips keep full-size tiles."""
    try:
        kind = jax.devices()[0].device_kind.lower().replace(" ", "")
    except Exception:
        return 1
    return 2 if ("v7" in kind or "tpu7" in kind) else 1


_NCORES = _detect_ncores()


def _pick_tile_rows(rows, ncores, max_rows):
    """Largest multiple-of-8 row tile <= max_rows covering rows/ncores per core."""
    per_core = -(-rows // ncores)
    t = min(max_rows, _round_up(per_core, _SUBLANES))
    if t > rows:                       # only possible when rows is small/unaligned
        t = max(_SUBLANES, (rows // _SUBLANES) * _SUBLANES)
    return t


def _max_rows_for(bytes_per_row):
    cap = (_VMEM_BUDGET // (2 * bytes_per_row)) // _SUBLANES * _SUBLANES
    return min(_MAX_TILE_ROWS, max(_SUBLANES, cap))


def _flat_iota():
    """Per-vreg flat pixel offsets 0..1023 within an (8,128) chunk."""
    return (lax.broadcasted_iota(jnp.int32, (_SUBLANES, _LANES), 0) * _LANES
            + lax.broadcasted_iota(jnp.int32, (_SUBLANES, _LANES), 1))


def _compiler_params(n_axes):
    return pltpu.CompilerParams(
        dimension_semantics=("parallel",) + ("arbitrary",) * (n_axes - 1),
        vmem_limit_bytes=_VMEM_LIMIT,
    )


# -----------------------------------------------------------------------------
# Kernels
# -----------------------------------------------------------------------------
def _av_ce_kernel(weights, valid_pix, tile_rows, row_blocks,
                  logits_ref, labels_ref, out_ref):
    """Weighted cross-entropy partial sums, accumulated per 8-row chunk.

    logits_ref: (1, C, tile_rows, 128) block, labels_ref: (1, tile_rows, 128) int32.
    out_ref:    (1, 2, 8, 128) resident accumulator: [0]=sum(w[y]*nll), [1]=sum(w[y]).
    Pixels beyond the (static) valid count are masked out per chunk.
    """
    ci = pl.program_id(0)
    ni = pl.program_id(1)
    ri = pl.program_id(2)

    @pl.when((ni == 0) & (ri == 0))
    def _init():
        out_ref[...] = jnp.zeros_like(out_ref)

    num_classes = logits_ref.shape[1]
    row_start = (ci * row_blocks + ri) * tile_rows     # intended (unclamped) row start
    flat = _flat_iota()
    n_chunks = tile_rows // _SUBLANES

    def body(i, carry):
        acc_wnll, acc_w = carry
        r0 = pl.multiple_of(i * _SUBLANES, _SUBLANES)
        valid = flat < (valid_pix - (row_start + r0) * _LANES)
        lbl = labels_ref[0, pl.ds(r0, _SUBLANES), :]

        xs = [logits_ref[0, c, pl.ds(r0, _SUBLANES), :].astype(jnp.float32)
              for c in range(num_classes)]
        m = xs[0]
        for c in range(1, num_classes):
            m = jnp.maximum(m, xs[c])
        sum_exp = jnp.zeros_like(m)
        true_logit = jnp.zeros_like(m)
        w_pix = jnp.zeros_like(m)
        for c in range(num_classes):
            sum_exp = sum_exp + jnp.exp(xs[c] - m)
            onehot = (lbl == c).astype(jnp.float32)     # one compare + two FMAs / class
            true_logit = true_logit + onehot * xs[c]
            w_pix = w_pix + onehot * jnp.float32(weights[c])

        nll = m + jnp.log(sum_exp) - true_logit         # = -log_softmax[label]
        acc_wnll = acc_wnll + jnp.where(valid, w_pix * nll, 0.0)
        acc_w = acc_w + jnp.where(valid, w_pix, 0.0)
        return acc_wnll, acc_w

    zero = jnp.zeros((_SUBLANES, _LANES), jnp.float32)
    acc_wnll, acc_w = lax.fori_loop(0, n_chunks, body, (zero, zero))
    out_ref[0, 0] += acc_wnll
    out_ref[0, 1] += acc_w


def _vessel_logits_kernel(valid_pix, tile_rows, row_blocks,
                          pred_ref, label_ref, out_ref):
    """BCE-with-logits + dice-on-sigmoid partial sums (chunked accumulation).

    out_ref (1, 4, 8, 128): [bce, sig*y, sig, y].  One EUP exp per element (reused
    for bce and sigmoid); sigmoid denominator via approx reciprocal + Newton step.
    """
    ci = pl.program_id(0)
    ri = pl.program_id(1)

    @pl.when(ri == 0)
    def _init():
        out_ref[...] = jnp.zeros_like(out_ref)

    row_start = (ci * row_blocks + ri) * tile_rows
    flat = _flat_iota()
    n_chunks = tile_rows // _SUBLANES

    def body(i, carry):
        s_bce, s_int, s_sig, s_lab = carry
        r0 = pl.multiple_of(i * _SUBLANES, _SUBLANES)
        valid = flat < (valid_pix - (row_start + r0) * _LANES)
        x = pred_ref[pl.ds(r0, _SUBLANES), :].astype(jnp.float32)
        y = label_ref[pl.ds(r0, _SUBLANES), :].astype(jnp.float32)

        t = jnp.exp(-jnp.abs(x))                        # single EUP exp, reused below
        bce = jnp.maximum(x, 0.0) - x * y + jnp.log1p(t)
        den = 1.0 + t
        inv = pl.reciprocal(den, approx=True)
        inv = inv * (2.0 - den * inv)                   # one Newton step -> ~f32 exact
        sig = jnp.where(x >= 0.0, inv, t * inv)

        s_bce = s_bce + jnp.where(valid, bce, 0.0)
        s_int = s_int + jnp.where(valid, sig * y, 0.0)
        s_sig = s_sig + jnp.where(valid, sig, 0.0)
        s_lab = s_lab + jnp.where(valid, y, 0.0)
        return s_bce, s_int, s_sig, s_lab

    zero = jnp.zeros((_SUBLANES, _LANES), jnp.float32)
    s_bce, s_int, s_sig, s_lab = lax.fori_loop(0, n_chunks, body, (zero,) * 4)
    out_ref[0, 0] += s_bce
    out_ref[0, 1] += s_int
    out_ref[0, 2] += s_sig
    out_ref[0, 3] += s_lab


def _vessel_probs_kernel(valid_pix, tile_rows, row_blocks,
                         pred_ref, label_ref, out_ref):
    """BCE on probabilities (PyTorch BCELoss, logs clamped at -100) + dice sums.

    out_ref (1, 4, 8, 128): [bce, p*y, p, y].
    """
    ci = pl.program_id(0)
    ri = pl.program_id(1)

    @pl.when(ri == 0)
    def _init():
        out_ref[...] = jnp.zeros_like(out_ref)

    row_start = (ci * row_blocks + ri) * tile_rows
    flat = _flat_iota()
    n_chunks = tile_rows // _SUBLANES

    def body(i, carry):
        s_bce, s_int, s_p, s_lab = carry
        r0 = pl.multiple_of(i * _SUBLANES, _SUBLANES)
        valid = flat < (valid_pix - (row_start + r0) * _LANES)
        p = pred_ref[pl.ds(r0, _SUBLANES), :].astype(jnp.float32)
        y = label_ref[pl.ds(r0, _SUBLANES), :].astype(jnp.float32)

        logp = jnp.maximum(jnp.log(p), -100.0)
        log1mp = jnp.maximum(jnp.log1p(-p), -100.0)
        bce = -(y * logp + (1.0 - y) * log1mp)

        s_bce = s_bce + jnp.where(valid, bce, 0.0)
        s_int = s_int + jnp.where(valid, p * y, 0.0)
        s_p = s_p + jnp.where(valid, p, 0.0)
        s_lab = s_lab + jnp.where(valid, y, 0.0)
        return s_bce, s_int, s_p, s_lab

    zero = jnp.zeros((_SUBLANES, _LANES), jnp.float32)
    s_bce, s_int, s_p, s_lab = lax.fori_loop(0, n_chunks, body, (zero,) * 4)
    out_ref[0, 0] += s_bce
    out_ref[0, 1] += s_int
    out_ref[0, 2] += s_p
    out_ref[0, 3] += s_lab


# -----------------------------------------------------------------------------
# pallas_call wrappers
# -----------------------------------------------------------------------------
def _padded_rows(pix):
    """Pixel count padded only when needed (not lane-aligned or tiny image)."""
    pix_pad = max(_round_up(pix, _LANES), _SUBLANES * _LANES)
    return pix_pad, pix_pad // _LANES


def _block_index(ci, ri, rt, nb, ncores):
    b = ci * rt + ri
    # Clamp only when the per-core split can overshoot; the in-kernel mask (based on
    # the unclamped program ids) zeroes any duplicated block's contribution.
    return jnp.minimum(b, nb - 1) if (nb % ncores) else b


def av_ce_sums(logits_nchw, labels_nhw, weights):
    """-> (2,) f32: [sum_i w[y_i] * nll_i, sum_i w[y_i]] over all valid pixels."""
    n, c, h, w = logits_nchw.shape
    pix = h * w
    pix_pad, rows = _padded_rows(pix)

    lg = logits_nchw.reshape(n, c, pix)                  # free reshape, no transpose
    lb = labels_nhw.reshape(n, pix).astype(jnp.int32)
    if pix_pad != pix:
        # TODO(synk): for H*W not a multiple of 128 this pad is a full copy of the
        # logits; a fully pad-free path would need a flat-pixel-axis BlockSpec.
        lg = jnp.pad(lg, ((0, 0), (0, 0), (0, pix_pad - pix)))
        lb = jnp.pad(lb, ((0, 0), (0, pix_pad - pix)))
    lg = lg.reshape(n, c, rows, _LANES)
    lb = lb.reshape(n, rows, _LANES)

    max_rows = _max_rows_for((c * 4 + 4) * _LANES)
    tile_rows = _pick_tile_rows(rows, _NCORES, max_rows)
    nb = -(-rows // tile_rows)                           # total row blocks
    rt = -(-nb // _NCORES)                               # row blocks per core

    lg_map = lambda ci, ni, ri: (ni, 0, _block_index(ci, ri, rt, nb, _NCORES), 0)
    lb_map = lambda ci, ni, ri: (ni, _block_index(ci, ri, rt, nb, _NCORES), 0)

    out = pl.pallas_call(
        functools.partial(_av_ce_kernel, tuple(float(x) for x in weights),
                          pix, tile_rows, rt),
        out_shape=jax.ShapeDtypeStruct((_NCORES, 2, _SUBLANES, _LANES), jnp.float32),
        grid=(_NCORES, n, rt),
        in_specs=[
            pl.BlockSpec((1, c, tile_rows, _LANES), lg_map),
            pl.BlockSpec((1, tile_rows, _LANES), lb_map),
        ],
        out_specs=pl.BlockSpec((1, 2, _SUBLANES, _LANES),
                               lambda ci, ni, ri: (ci, 0, 0, 0)),
        compiler_params=_compiler_params(3),
    )(lg, lb)
    return jnp.sum(out, axis=(0, 2, 3))                  # (2,)


def _vessel_sums(kernel_fn, pred, label):
    """-> (4,) f32 partial sums [bce, inter, pred, label] over all valid pixels."""
    pix = pred.size
    pix_pad, rows = _padded_rows(pix)

    # TODO(synk): streaming labelVessel as int8/bool would cut ~37% of this kernel's
    # HBM traffic, but only pays off when the cast is amortized over several heads.
    x = pred.reshape(pix)
    y = label.reshape(pix)
    if pix_pad != pix:
        x = jnp.pad(x, (0, pix_pad - pix))
        y = jnp.pad(y, (0, pix_pad - pix))
    x = x.reshape(rows, _LANES)
    y = y.reshape(rows, _LANES)

    max_rows = _max_rows_for((x.dtype.itemsize + y.dtype.itemsize) * _LANES)
    tile_rows = _pick_tile_rows(rows, _NCORES, max_rows)
    nb = -(-rows // tile_rows)
    rt = -(-nb // _NCORES)

    in_map = lambda ci, ri: (_block_index(ci, ri, rt, nb, _NCORES), 0)

    out = pl.pallas_call(
        functools.partial(kernel_fn, pix, tile_rows, rt),
        out_shape=jax.ShapeDtypeStruct((_NCORES, 4, _SUBLANES, _LANES), jnp.float32),
        grid=(_NCORES, rt),
        in_specs=[pl.BlockSpec((tile_rows, _LANES), in_map),
                  pl.BlockSpec((tile_rows, _LANES), in_map)],
        out_specs=pl.BlockSpec((1, 4, _SUBLANES, _LANES),
                               lambda ci, ri: (ci, 0, 0, 0)),
        compiler_params=_compiler_params(2),
    )(x, y)
    return jnp.sum(out, axis=(0, 2, 3))                  # (4,)


def vessel_logits_sums(pred, label):
    return _vessel_sums(_vessel_logits_kernel, pred, label)


def vessel_probs_sums(pred, label):
    return _vessel_sums(_vessel_probs_kernel, pred, label)


# -----------------------------------------------------------------------------
# MultiLoss module (JAX/Pallas version of the PyTorch nn.Module forward)
# -----------------------------------------------------------------------------
class MultiLoss:
    def __init__(self, config=None, flag=False, sign=False, ep=1e-6):
        del config  # only carried the torch device in the original module
        self.ep = float(ep)
        self.flag = bool(flag)
        self.sign = bool(sign)
        self.av_weight = (1.0, 1.0, 3.0, 5.0)   # nn.CrossEntropyLoss(weight=[1,1,3,5])
        self._forward = jax.jit(self._forward_impl)   # fuse kernels + epilogue

    def _av_ce(self, logits, labels):
        s = av_ce_sums(logits, labels, self.av_weight)
        return s[0] / s[1]

    def _dice(self, inter, pred_sum, label_sum):
        return 1.0 - (2.0 * inter + self.ep) / (pred_sum + label_sum + self.ep)

    def _vessel_logit_terms(self, pred, label):
        s = vessel_logits_sums(pred, label)
        return s[0] / float(pred.size), self._dice(s[1], s[2], s[3])

    def _vessel_prob_terms(self, pred, label):
        s = vessel_probs_sums(pred, label)
        return s[0] / float(pred.size), self._dice(s[1], s[2], s[3])

    def _forward_impl(self, predAv, predVessel, labelAv, labelVessel):
        # TODO(synk): in deep-supervision mode the per-head passes could be fused
        # into one pallas_call (heads on an extra grid axis) so the label is
        # streamed from HBM only once per pixel tile instead of once per head.
        if self.flag:
            n = len(predAv)
            avLoss = 0.0
            for idx, pred in enumerate(predAv):
                avLoss = avLoss + (1.0 / (n - idx)) * self._av_ce(pred, labelAv)
        else:
            avLoss = self._av_ce(predAv, labelAv)

        vesselLoss = 0.0
        if self.sign:
            n = len(predVessel)
            for idx, pred in enumerate(predVessel):
                if idx == n - 1:
                    bce, dice = self._vessel_prob_terms(pred, labelVessel)
                    vesselLoss = vesselLoss + bce + dice
                else:
                    bce, dice = self._vessel_logit_terms(pred, labelVessel)
                    coef = 1.0 / (n - idx)
                    vesselLoss = vesselLoss + coef * bce + 0.1 * coef * dice
        else:
            bce, dice = self._vessel_logit_terms(predVessel, labelVessel)
            vesselLoss = vesselLoss + bce + 0.1 * dice

        return vesselLoss + avLoss

    def __call__(self, predAv, predVessel, labelAv, labelVessel):
        return self._forward(predAv, predVessel, labelAv, labelVessel)


# -----------------------------------------------------------------------------
# Pure-JAX reference (mirrors the PyTorch forward) for correctness checks
# -----------------------------------------------------------------------------
def _ref_ce(logits, labels, w):
    logp = jax.nn.log_softmax(logits.astype(jnp.float32), axis=1)
    nll = -jnp.take_along_axis(logp, labels[:, None, :, :].astype(jnp.int32), axis=1)[:, 0]
    wp = w[labels]
    return jnp.sum(wp * nll) / jnp.sum(wp)


def _ref_bce_logits(x, y):
    x = x.astype(jnp.float32); y = y.astype(jnp.float32)
    return jnp.mean(jnp.maximum(x, 0.0) - x * y + jnp.log1p(jnp.exp(-jnp.abs(x))))


def _ref_bce_probs(p, y):
    p = p.astype(jnp.float32); y = y.astype(jnp.float32)
    logp = jnp.maximum(jnp.log(p), -100.0)
    log1mp = jnp.maximum(jnp.log1p(-p), -100.0)
    return jnp.mean(-(y * logp + (1.0 - y) * log1mp))


def _ref_dice(p, y, ep):
    p = p.astype(jnp.float32); y = y.astype(jnp.float32)
    return 1.0 - (2.0 * jnp.sum(p * y) + ep) / (jnp.sum(p) + jnp.sum(y) + ep)


def _ref_multiloss(predAv, predVessel, labelAv, labelVessel, flag, sign, ep=1e-6):
    w = jnp.array([1.0, 1.0, 3.0, 5.0], jnp.float32)
    if flag:
        n = len(predAv)
        av = sum((1.0 / (n - i)) * _ref_ce(p, labelAv, w) for i, p in enumerate(predAv))
    else:
        av = _ref_ce(predAv, labelAv, w)
    if sign:
        n = len(predVessel)
        v = 0.0
        for i, p in enumerate(predVessel):
            if i == n - 1:
                v = v + _ref_bce_probs(p, labelVessel) + _ref_dice(p, labelVessel, ep)
            else:
                c = 1.0 / (n - i)
                v = (v + c * _ref_bce_logits(p, labelVessel)
                     + 0.1 * c * _ref_dice(jax.nn.sigmoid(p.astype(jnp.float32)),
                                           labelVessel, ep))
    else:
        v = (_ref_bce_logits(predVessel, labelVessel)
             + 0.1 * _ref_dice(jax.nn.sigmoid(predVessel.astype(jnp.float32)),
                               labelVessel, ep))
    return v + av


# -----------------------------------------------------------------------------
# Demo
# -----------------------------------------------------------------------------
if __name__ == "__main__":
    key = jax.random.PRNGKey(0)
    k1, k2, k3, k4, k5, k6, k7 = jax.random.split(key, 7)

    N, C, H, W = 2, 4, 16, 16
    predAv = jax.random.normal(k1, (N, C, H, W), dtype=jnp.float32)       # AV logits
    labelAv = jax.random.randint(k2, (N, H, W), 0, C, dtype=jnp.int32)    # AV labels
    predVessel = jax.random.normal(k3, (N, 1, H, W), dtype=jnp.float32)   # vessel logits
    labelVessel = (jax.random.uniform(k4, (N, 1, H, W)) > 0.5).astype(jnp.float32)

    # single-head mode (flag=False, sign=False)
    loss_fn = MultiLoss(config=None, flag=False, sign=False)
    loss = jax.block_until_ready(loss_fn(predAv, predVessel, labelAv, labelVessel))
    ref = jax.block_until_ready(
        _ref_multiloss(predAv, predVessel, labelAv, labelVessel, False, False))
    assert jnp.allclose(loss, ref, rtol=1e-4, atol=1e-4), (loss, ref)

    # deep-supervision mode (flag=True, sign=True): lists of heads
    predAvList = [predAv, jax.random.normal(k5, (N, C, H, W), dtype=jnp.float32)]
    predVesselList = [
        jax.random.normal(k6, (N, 1, H, W), dtype=jnp.float32),                 # logits head
        jax.nn.sigmoid(jax.random.normal(k7, (N, 1, H, W), dtype=jnp.float32)), # final prob head
    ]
    loss_fn2 = MultiLoss(config=None, flag=True, sign=True)
    loss2 = jax.block_until_ready(
        loss_fn2(predAvList, predVesselList, labelAv, labelVessel))
    ref2 = jax.block_until_ready(
        _ref_multiloss(predAvList, predVesselList, labelAv, labelVessel, True, True))
    assert jnp.allclose(loss2, ref2, rtol=1e-4, atol=1e-4), (loss2, ref2)

    print("KERNEL_OK")
</pallas_src>

<mosaic_0001>
module attributes {stable_mosaic.version = 11 : i64} {
  func.func @_vessel_logits_kernel(%arg0: i32, %arg1: i32, %arg2: memref<8x128xf32, #tpu.memory_space<vmem>>, %arg3: memref<8x128xf32, #tpu.memory_space<vmem>>, %arg4: memref<1x4x8x128xf32, #tpu.memory_space<vmem>>) attributes {dimension_semantics = [#tpu.dimension_semantics<parallel>, #tpu.dimension_semantics<arbitrary>], iteration_bounds = array<i64: 1, 1>, scalar_prefetch = 0 : i64, scratch_operands = 0 : i64, tpu.core_type = #tpu.core_type<tc>, window_params = [{transform_indices = @transform_0, window_bounds = array<i64: 8, 128>}, {transform_indices = @transform_1, window_bounds = array<i64: 8, 128>}, {transform_indices = @transform_2, window_bounds = array<i64: 1, 4, 8, 128>}]} {
    %c0_i32 = arith.constant 0 : i32
    %0 = arith.cmpi eq, %arg1, %c0_i32 : i32
    %1 = arith.extui %0 : i1 to i32
    %c0_i32_0 = arith.constant 0 : i32
    %2 = arith.cmpi ne, %1, %c0_i32_0 : i32
    scf.if %2 {
      %cst_44 = arith.constant 0.000000e+00 : f32
      %81 = vector.broadcast %cst_44 : f32 to vector<1x4x8x128xf32>
      %c0_45 = arith.constant 0 : index
      %c0_46 = arith.constant 0 : index
      %c0_47 = arith.constant 0 : index
      %c0_48 = arith.constant 0 : index
      %82 = vector.load %arg4[%c0_45, %c0_46, %c0_47, %c0_48] : memref<1x4x8x128xf32, #tpu.memory_space<vmem>>, vector<1x4x8x128xf32>
      tpu.vector_store %arg4[%c0_45, %c0_46, %c0_47, %c0_48], %81 {strides = array<i32>} : memref<1x4x8x128xf32, #tpu.memory_space<vmem>>, vector<1x4x8x128xf32>,
    } else {
    }
    %c1_i32 = arith.constant 1 : i32
    %3 = arith.muli %arg0, %c1_i32 : i32
    %4 = arith.addi %3, %arg1 : i32
    %c8_i32 = arith.constant 8 : i32
    %5 = arith.muli %4, %c8_i32 : i32
    %6 = tpu.iota {dimensions = array<i32: 0>} : vector<8x128xi32>
    %c128_i32 = arith.constant 128 : i32
    %7 = vector.broadcast %c128_i32 : i32 to vector<8x128xi32>
    %8 = arith.muli %6, %7 : vector<8x128xi32>
    %9 = tpu.iota {dimensions = array<i32: 1>} : vector<8x128xi32>
    %10 = arith.addi %8, %9 : vector<8x128xi32>
    %cst = arith.constant 0.000000e+00 : f32
    %11 = vector.broadcast %cst : f32 to vector<8x128xf32>
    %c0_i32_1 = arith.constant 0 : i32
    %c8_i32_2 = arith.constant 8 : i32
    %12 = arith.muli %c0_i32_1, %c8_i32_2 : i32
    %13 = tpu.assume_multiple %12, 8 : i32
    %14 = arith.addi %5, %13 : i32
    %c128_i32_3 = arith.constant 128 : i32
    %15 = arith.muli %14, %c128_i32_3 : i32
    %c512_i32 = arith.constant 512 : i32
    %16 = arith.subi %c512_i32, %15 : i32
    %17 = vector.broadcast %16 : i32 to vector<8x128xi32>
    %18 = arith.cmpi slt, %10, %17 : vector<8x128xi32>
    %19 = arith.index_cast %13 : i32 to index
    %c0 = arith.constant 0 : index
    %20 = vector.load %arg2[%19, %c0] : memref<8x128xf32, #tpu.memory_space<vmem>>, vector<8x128xf32>
    %21 = arith.index_cast %13 : i32 to index
    %c0_4 = arith.constant 0 : index
    %22 = vector.load %arg3[%21, %c0_4] : memref<8x128xf32, #tpu.memory_space<vmem>>, vector<8x128xf32>
    %23 = math.absf %20 : vector<8x128xf32>
    %cst_5 = arith.constant 0.000000e+00 : f32
    %24 = vector.broadcast %cst_5 : f32 to vector<8x128xf32>
    %25 = arith.subf %24, %23 : vector<8x128xf32>
    %26 = math.exp %25 : vector<8x128xf32>
    %cst_6 = arith.constant 0.000000e+00 : f32
    %27 = vector.broadcast %cst_6 : f32 to vector<8x128xf32>
    %28 = arith.maximumf %20, %27 : vector<8x128xf32>
    %29 = arith.mulf %20, %22 : vector<8x128xf32>
    %30 = arith.subf %28, %29 : vector<8x128xf32>
    %31 = math.log1p %26 : vector<8x128xf32>
    %32 = arith.addf %30, %31 : vector<8x128xf32>
    %cst_7 = arith.constant 1.000000e+00 : f32
    %33 = vector.broadcast %cst_7 : f32 to vector<8x128xf32>
    %34 = arith.addf %33, %26 : vector<8x128xf32>
    %35 = tpu.reciprocal %34 {approx = true} : vector<8x128xf32> -> vector<8x128xf32>
    %36 = arith.mulf %34, %35 : vector<8x128xf32>
    %cst_8 = arith.constant 2.000000e+00 : f32
    %37 = vector.broadcast %cst_8 : f32 to vector<8x128xf32>
    %38 = arith.subf %37, %36 : vector<8x128xf32>
    %39 = arith.mulf %35, %38 : vector<8x128xf32>
    %cst_9 = arith.constant 0.000000e+00 : f32
    %40 = vector.broadcast %cst_9 : f32 to vector<8x128xf32>
    %41 = arith.cmpf oge, %20, %40 : vector<8x128xf32>
    %42 = arith.mulf %26, %39 : vector<8x128xf32>
    %43 = arith.select %41, %39, %42 : vector<8x128xi1>, vector<8x128xf32>
    %cst_10 = arith.constant 0.000000e+00 : f32
    %44 = vector.broadcast %cst_10 : f32 to vector<8x128xf32>
    %45 = arith.select %18, %32, %44 : vector<8x128xi1>, vector<8x128xf32>
    %46 = arith.addf %11, %45 : vector<8x128xf32>
    %47 = arith.mulf %43, %22 : vector<8x128xf32>
    %cst_11 = arith.constant 0.000000e+00 : f32
    %48 = vector.broadcast %cst_11 : f32 to vector<8x128xf32>
    %49 = arith.select %18, %47, %48 : vector<8x128xi1>, vector<8x128xf32>
    %50 = arith.addf %11, %49 : vector<8x128xf32>
    %cst_12 = arith.constant 0.000000e+00 : f32
    %51 = vector.broadcast %cst_12 : f32 to vector<8x128xf32>
    %52 = arith.select %18, %43, %51 : vector<8x128xi1>, vector<8x128xf32>
    %53 = arith.addf %11, %52 : vector<8x128xf32>
    %cst_13 = arith.constant 0.000000e+00 : f32
    %54 = vector.broadcast %cst_13 : f32 to vector<8x128xf32>
    %55 = arith.select %18, %22, %54 : vector<8x128xi1>, vector<8x128xf32>
    %56 = arith.addf %11, %55 : vector<8x128xf32>
    %c1_i32_14 = arith.constant 1 : i32
    %c0_15 = arith.constant 0 : index
    %c0_16 = arith.constant 0 : index
    %c0_17 = arith.constant 0 : index
    %c0_18 = arith.constant 0 : index
    %57 = vector.load %arg4[%c0_15, %c0_16, %c0_17, %c0_18] : memref<1x4x8x128xf32, #tpu.memory_space<vmem>>, vector<1x1x8x128xf32>
    %58 = vector.shape_cast %57 : vector<1x1x8x128xf32> to vector<8x128xf32>
    %59 = arith.addf %58, %46 : vector<8x128xf32>
    %c0_19 = arith.constant 0 : index
    %c0_20 = arith.constant 0 : index
    %c0_21 = arith.constant 0 : index
    %c0_22 = arith.constant 0 : index
    %60 = vector.load %arg4[%c0_19, %c0_20, %c0_21, %c0_22] : memref<1x4x8x128xf32, #tpu.memory_space<vmem>>, vector<1x1x8x128xf32>
    %61 = vector.shape_cast %60 : vector<1x1x8x128xf32> to vector<8x128xf32>
    %62 = vector.shape_cast %59 : vector<8x128xf32> to vector<1x1x8x128xf32>
    tpu.vector_store %arg4[%c0_19, %c0_20, %c0_21, %c0_22], %62 {strides = array<i32>} : memref<1x4x8x128xf32, #tpu.memory_space<vmem>>, vector<1x1x8x128xf32>,
    %c0_23 = arith.constant 0 : index
    %c1 = arith.constant 1 : index
    %c0_24 = arith.constant 0 : index
    %c0_25 = arith.constant 0 : index
    %63 = vector.load %arg4[%c0_23, %c1, %c0_24, %c0_25] : memref<1x4x8x128xf32, #tpu.memory_space<vmem>>, vector<1x1x8x128xf32>
    %64 = vector.shape_cast %63 : vector<1x1x8x128xf32> to vector<8x128xf32>
    %65 = arith.addf %64, %50 : vector<8x128xf32>
    %c0_26 = arith.constant 0 : index
    %c1_27 = arith.constant 1 : index
    %c0_28 = arith.constant 0 : index
    %c0_29 = arith.constant 0 : index
    %66 = vector.load %arg4[%c0_26, %c1_27, %c0_28, %c0_29] : memref<1x4x8x128xf32, #tpu.memory_space<vmem>>, vector<1x1x8x128xf32>
    %67 = vector.shape_cast %66 : vector<1x1x8x128xf32> to vector<8x128xf32>
    %68 = vector.shape_cast %65 : vector<8x128xf32> to vector<1x1x8x128xf32>
    tpu.vector_store %arg4[%c0_26, %c1_27, %c0_28, %c0_29], %68 {strides = array<i32>} : memref<1x4x8x128xf32, #tpu.memory_space<vmem>>, vector<1x1x8x128xf32>,
    %c0_30 = arith.constant 0 : index
    %c2 = arith.constant 2 : index
    %c0_31 = arith.constant 0 : index
    %c0_32 = arith.constant 0 : index
    %69 = vector.load %arg4[%c0_30, %c2, %c0_31, %c0_32] : memref<1x4x8x128xf32, #tpu.memory_space<vmem>>, vector<1x1x8x128xf32>
    %70 = vector.shape_cast %69 : vector<1x1x8x128xf32> to vector<8x128xf32>
    %71 = arith.addf %70, %53 : vector<8x128xf32>
    %c0_33 = arith.constant 0 : index
    %c2_34 = arith.constant 2 : index
    %c0_35 = arith.constant 0 : index
    %c0_36 = arith.constant 0 : index
    %72 = vector.load %arg4[%c0_33, %c2_34, %c0_35, %c0_36] : memref<1x4x8x128xf32, #tpu.memory_space<vmem>>, vector<1x1x8x128xf32>
    %73 = vector.shape_cast %72 : vector<1x1x8x128xf32> to vector<8x128xf32>
    %74 = vector.shape_cast %71 : vector<8x128xf32> to vector<1x1x8x128xf32>
    tpu.vector_store %arg4[%c0_33, %c2_34, %c0_35, %c0_36], %74 {strides = array<i32>} : memref<1x4x8x128xf32, #tpu.memory_space<vmem>>, vector<1x1x8x128xf32>,
    %c0_37 = arith.constant 0 : index
    %c3 = arith.constant 3 : index
    %c0_38 = arith.constant 0 : index
    %c0_39 = arith.constant 0 : index
    %75 = vector.load %arg4[%c0_37, %c3, %c0_38, %c0_39] : memref<1x4x8x128xf32, #tpu.memory_space<vmem>>, vector<1x1x8x128xf32>
    %76 = vector.shape_cast %75 : vector<1x1x8x128xf32> to vector<8x128xf32>
    %77 = arith.addf %76, %56 : vector<8x128xf32>
    %c0_40 = arith.constant 0 : index
    %c3_41 = arith.constant 3 : index
    %c0_42 = arith.constant 0 : index
    %c0_43 = arith.constant 0 : index
    %78 = vector.load %arg4[%c0_40, %c3_41, %c0_42, %c0_43] : memref<1x4x8x128xf32, #tpu.memory_space<vmem>>, vector<1x1x8x128xf32>
    %79 = vector.shape_cast %78 : vector<1x1x8x128xf32> to vector<8x128xf32>
    %80 = vector.shape_cast %77 : vector<8x128xf32> to vector<1x1x8x128xf32>
    tpu.vector_store %arg4[%c0_40, %c3_41, %c0_42, %c0_43], %80 {strides = array<i32>} : memref<1x4x8x128xf32, #tpu.memory_space<vmem>>, vector<1x1x8x128xf32>,
    return
  }
  func.func @transform_0(%arg0: i32, %arg1: i32) -> (i32, i32) {
    %c1_i32 = arith.constant 1 : i32
    %0 = arith.muli %arg0, %c1_i32 : i32
    %1 = arith.addi %0, %arg1 : i32
    %c0_i32 = arith.constant 0 : i32
    %c0_i32_0 = arith.constant 0 : i32
    return %1, %c0_i32 : i32, i32
  }
  func.func @transform_1(%arg0: i32, %arg1: i32) -> (i32, i32) {
    %c1_i32 = arith.constant 1 : i32
    %0 = arith.muli %arg0, %c1_i32 : i32
    %1 = arith.addi %0, %arg1 : i32
    %c0_i32 = arith.constant 0 : i32
    %c0_i32_0 = arith.constant 0 : i32
    return %1, %c0_i32 : i32, i32
  }
  func.func @transform_2(%arg0: i32, %arg1: i32) -> (i32, i32, i32, i32) {
    %c0_i32 = arith.constant 0 : i32
    %c0_i32_0 = arith.constant 0 : i32
    %c0_i32_1 = arith.constant 0 : i32
    %c0_i32_2 = arith.constant 0 : i32
    return %arg0, %c0_i32, %c0_i32_0, %c0_i32_1 : i32, i32, i32, i32
  }
}

module attributes {stable_mosaic.version = 11 : i64} {
  func.func @_av_ce_kernel(%arg0: i32, %arg1: i32, %arg2: i32, %arg3: memref<1x4x8x128xf32, #tpu.memory_space<vmem>>, %arg4: memref<1x8x128xi32, #tpu.memory_space<vmem>>, %arg5: memref<1x2x8x128xf32, #tpu.memory_space<vmem>>) attributes {dimension_semantics = [#tpu.dimension_semantics<parallel>, #tpu.dimension_semantics<arbitrary>, #tpu.dimension_semantics<arbitrary>], iteration_bounds = array<i64: 1, 2, 1>, scalar_prefetch = 0 : i64, scratch_operands = 0 : i64, tpu.core_type = #tpu.core_type<tc>, window_params = [{transform_indices = @transform_0, window_bounds = array<i64: 1, 4, 8, 128>}, {transform_indices = @transform_1, window_bounds = array<i64: 1, 8, 128>}, {transform_indices = @transform_2, window_bounds = array<i64: 1, 2, 8, 128>}]} {
    %c0_i32 = arith.constant 0 : i32
    %0 = arith.cmpi eq, %arg1, %c0_i32 : i32
    %c0_i32_0 = arith.constant 0 : i32
    %1 = arith.cmpi eq, %arg2, %c0_i32_0 : i32
    %2 = arith.andi %0, %1 : i1
    %3 = arith.extui %2 : i1 to i32
    %c0_i32_1 = arith.constant 0 : i32
    %4 = arith.cmpi ne, %3, %c0_i32_1 : i32
    scf.if %4 {
      %cst_43 = arith.constant 0.000000e+00 : f32
      %112 = vector.broadcast %cst_43 : f32 to vector<1x2x8x128xf32>
      %c0_44 = arith.constant 0 : index
      %c0_45 = arith.constant 0 : index
      %c0_46 = arith.constant 0 : index
      %c0_47 = arith.constant 0 : index
      %113 = vector.load %arg5[%c0_44, %c0_45, %c0_46, %c0_47] : memref<1x2x8x128xf32, #tpu.memory_space<vmem>>, vector<1x2x8x128xf32>
      tpu.vector_store %arg5[%c0_44, %c0_45, %c0_46, %c0_47], %112 {strides = array<i32>} : memref<1x2x8x128xf32, #tpu.memory_space<vmem>>, vector<1x2x8x128xf32>,
    } else {
    }
    %c1_i32 = arith.constant 1 : i32
    %5 = arith.muli %arg0, %c1_i32 : i32
    %6 = arith.addi %5, %arg2 : i32
    %c8_i32 = arith.constant 8 : i32
    %7 = arith.muli %6, %c8_i32 : i32
    %8 = tpu.iota {dimensions = array<i32: 0>} : vector<8x128xi32>
    %c128_i32 = arith.constant 128 : i32
    %9 = vector.broadcast %c128_i32 : i32 to vector<8x128xi32>
    %10 = arith.muli %8, %9 : vector<8x128xi32>
    %11 = tpu.iota {dimensions = array<i32: 1>} : vector<8x128xi32>
    %12 = arith.addi %10, %11 : vector<8x128xi32>
    %cst = arith.constant 0.000000e+00 : f32
    %13 = vector.broadcast %cst : f32 to vector<8x128xf32>
    %c0_i32_2 = arith.constant 0 : i32
    %c8_i32_3 = arith.constant 8 : i32
    %14 = arith.muli %c0_i32_2, %c8_i32_3 : i32
    %15 = tpu.assume_multiple %14, 8 : i32
    %16 = arith.addi %7, %15 : i32
    %c128_i32_4 = arith.constant 128 : i32
    %17 = arith.muli %16, %c128_i32_4 : i32
    %c256_i32 = arith.constant 256 : i32
    %18 = arith.subi %c256_i32, %17 : i32
    %19 = vector.broadcast %18 : i32 to vector<8x128xi32>
    %20 = arith.cmpi slt, %12, %19 : vector<8x128xi32>
    %c0 = arith.constant 0 : index
    %21 = arith.index_cast %15 : i32 to index
    %c0_5 = arith.constant 0 : index
    %22 = vector.load %arg4[%c0, %21, %c0_5] : memref<1x8x128xi32, #tpu.memory_space<vmem>>, vector<1x8x128xi32>
    %23 = vector.shape_cast %22 : vector<1x8x128xi32> to vector<8x128xi32>
    %c0_6 = arith.constant 0 : index
    %c0_7 = arith.constant 0 : index
    %24 = arith.index_cast %15 : i32 to index
    %c0_8 = arith.constant 0 : index
    %25 = vector.load %arg3[%c0_6, %c0_7, %24, %c0_8] : memref<1x4x8x128xf32, #tpu.memory_space<vmem>>, vector<1x1x8x128xf32>
    %26 = vector.shape_cast %25 : vector<1x1x8x128xf32> to vector<8x128xf32>
    %c0_9 = arith.constant 0 : index
    %c1 = arith.constant 1 : index
    %27 = arith.index_cast %15 : i32 to index
    %c0_10 = arith.constant 0 : index
    %28 = vector.load %arg3[%c0_9, %c1, %27, %c0_10] : memref<1x4x8x128xf32, #tpu.memory_space<vmem>>, vector<1x1x8x128xf32>
    %29 = vector.shape_cast %28 : vector<1x1x8x128xf32> to vector<8x128xf32>
    %c0_11 = arith.constant 0 : index
    %c2 = arith.constant 2 : index
    %30 = arith.index_cast %15 : i32 to index
    %c0_12 = arith.constant 0 : index
    %31 = vector.load %arg3[%c0_11, %c2, %30, %c0_12] : memref<1x4x8x128xf32, #tpu.memory_space<vmem>>, vector<1x1x8x128xf32>
    %32 = vector.shape_cast %31 : vector<1x1x8x128xf32> to vector<8x128xf32>
    %c0_13 = arith.constant 0 : index
    %c3 = arith.constant 3 : index
    %33 = arith.index_cast %15 : i32 to index
    %c0_14 = arith.constant 0 : index
    %34 = vector.load %arg3[%c0_13, %c3, %33, %c0_14] : memref<1x4x8x128xf32, #tpu.memory_space<vmem>>, vector<1x1x8x128xf32>
    %35 = vector.shape_cast %34 : vector<1x1x8x128xf32> to vector<8x128xf32>
    %36 = arith.maximumf %26, %29 : vector<8x128xf32>
    %37 = arith.maximumf %36, %32 : vector<8x128xf32>
    %38 = arith.maximumf %37, %35 : vector<8x128xf32>
    %cst_15 = arith.constant 0.000000e+00 : f32
    %39 = vector.broadcast %cst_15 : f32 to vector<8x128xf32>
    %cst_16 = arith.constant 0.000000e+00 : f32
    %40 = vector.broadcast %cst_16 : f32 to vector<8x128xf32>
    %cst_17 = arith.constant 0.000000e+00 : f32
    %41 = vector.broadcast %cst_17 : f32 to vector<8x128xf32>
    %42 = arith.subf %26, %38 : vector<8x128xf32>
    %43 = math.exp %42 : vector<8x128xf32>
    %44 = arith.addf %39, %43 : vector<8x128xf32>
    %c0_i32_18 = arith.constant 0 : i32
    %45 = vector.broadcast %c0_i32_18 : i32 to vector<8x128xi32>
    %46 = arith.cmpi eq, %23, %45 : vector<8x128xi32>
    %47 = arith.extui %46 : vector<8x128xi1> to vector<8x128xi32>
    %48 = arith.sitofp %47 : vector<8x128xi32> to vector<8x128xf32>
    %49 = arith.mulf %48, %26 : vector<8x128xf32>
    %50 = arith.addf %40, %49 : vector<8x128xf32>
    %cst_19 = arith.constant 1.000000e+00 : f32
    %51 = vector.broadcast %cst_19 : f32 to vector<8x128xf32>
    %52 = arith.mulf %48, %51 : vector<8x128xf32>
    %53 = arith.addf %41, %52 : vector<8x128xf32>
    %54 = arith.subf %29, %38 : vector<8x128xf32>
    %55 = math.exp %54 : vector<8x128xf32>
    %56 = arith.addf %44, %55 : vector<8x128xf32>
    %c1_i32_20 = arith.constant 1 : i32
    %57 = vector.broadcast %c1_i32_20 : i32 to vector<8x128xi32>
    %58 = arith.cmpi eq, %23, %57 : vector<8x128xi32>
    %59 = arith.extui %58 : vector<8x128xi1> to vector<8x128xi32>
    %60 = arith.sitofp %59 : vector<8x128xi32> to vector<8x128xf32>
    %61 = arith.mulf %60, %29 : vector<8x128xf32>
    %62 = arith.addf %50, %61 : vector<8x128xf32>
    %cst_21 = arith.constant 1.000000e+00 : f32
    %63 = vector.broadcast %cst_21 : f32 to vector<8x128xf32>
    %64 = arith.mulf %60, %63 : vector<8x128xf32>
    %65 = arith.addf %53, %64 : vector<8x128xf32>
    %66 = arith.subf %32, %38 : vector<8x128xf32>
    %67 = math.exp %66 : vector<8x128xf32>
    %68 = arith.addf %56, %67 : vector<8x128xf32>
    %c2_i32 = arith.constant 2 : i32
    %69 = vector.broadcast %c2_i32 : i32 to vector<8x128xi32>
    %70 = arith.cmpi eq, %23, %69 : vector<8x128xi32>
    %71 = arith.extui %70 : vector<8x128xi1> to vector<8x128xi32>
    %72 = arith.sitofp %71 : vector<8x128xi32> to vector<8x128xf32>
    %73 = arith.mulf %72, %32 : vector<8x128xf32>
    %74 = arith.addf %62, %73 : vector<8x128xf32>
    %cst_22 = arith.constant 3.000000e+00 : f32
    %75 = vector.broadcast %cst_22 : f32 to vector<8x128xf32>
    %76 = arith.mulf %72, %75 : vector<8x128xf32>
    %77 = arith.addf %65, %76 : vector<8x128xf32>
    %78 = arith.subf %35, %38 : vector<8x128xf32>
    %79 = math.exp %78 : vector<8x128xf32>
    %80 = arith.addf %68, %79 : vector<8x128xf32>
    %c3_i32 = arith.constant 3 : i32
    %81 = vector.broadcast %c3_i32 : i32 to vector<8x128xi32>
    %82 = arith.cmpi eq, %23, %81 : vector<8x128xi32>
    %83 = arith.extui %82 : vector<8x128xi1> to vector<8x128xi32>
    %84 = arith.sitofp %83 : vector<8x128xi32> to vector<8x128xf32>
    %85 = arith.mulf %84, %35 : vector<8x128xf32>
    %86 = arith.addf %74, %85 : vector<8x128xf32>
    %cst_23 = arith.constant 5.000000e+00 : f32
    %87 = vector.broadcast %cst_23 : f32 to vector<8x128xf32>
    %88 = arith.mulf %84, %87 : vector<8x128xf32>
    %89 = arith.addf %77, %88 : vector<8x128xf32>
    %90 = math.log %80 : vector<8x128xf32>
    %91 = arith.addf %38, %90 : vector<8x128xf32>
    %92 = arith.subf %91, %86 : vector<8x128xf32>
    %93 = arith.mulf %89, %92 : vector<8x128xf32>
    %cst_24 = arith.constant 0.000000e+00 : f32
    %94 = vector.broadcast %cst_24 : f32 to vector<8x128xf32>
    %95 = arith.select %20, %93, %94 : vector<8x128xi1>, vector<8x128xf32>
    %96 = arith.addf %13, %95 : vector<8x128xf32>
    %cst_25 = arith.constant 0.000000e+00 : f32
    %97 = vector.broadcast %cst_25 : f32 to vector<8x128xf32>
    %98 = arith.select %20, %89, %97 : vector<8x128xi1>, vector<8x128xf32>
    %99 = arith.addf %13, %98 : vector<8x128xf32>
    %c1_i32_26 = arith.constant 1 : i32
    %c0_27 = arith.constant 0 : index
    %c0_28 = arith.constant 0 : index
    %c0_29 = arith.constant 0 : index
    %c0_30 = arith.constant 0 : index
    %100 = vector.load %arg5[%c0_27, %c0_28, %c0_29, %c0_30] : memref<1x2x8x128xf32, #tpu.memory_space<vmem>>, vector<1x1x8x128xf32>
    %101 = vector.shape_cast %100 : vector<1x1x8x128xf32> to vector<8x128xf32>
    %102 = arith.addf %101, %96 : vector<8x128xf32>
    %c0_31 = arith.constant 0 : index
    %c0_32 = arith.constant 0 : index
    %c0_33 = arith.constant 0 : index
    %c0_34 = arith.constant 0 : index
    %103 = vector.load %arg5[%c0_31, %c0_32, %c0_33, %c0_34] : memref<1x2x8x128xf32, #tpu.memory_space<vmem>>, vector<1x1x8x128xf32>
    %104 = vector.shape_cast %103 : vector<1x1x8x128xf32> to vector<8x128xf32>
    %105 = vector.shape_cast %102 : vector<8x128xf32> to vector<1x1x8x128xf32>
    tpu.vector_store %arg5[%c0_31, %c0_32, %c0_33, %c0_34], %105 {strides = array<i32>} : memref<1x2x8x128xf32, #tpu.memory_space<vmem>>, vector<1x1x8x128xf32>,
    %c0_35 = arith.constant 0 : index
    %c1_36 = arith.constant 1 : index
    %c0_37 = arith.constant 0 : index
    %c0_38 = arith.constant 0 : index
    %106 = vector.load %arg5[%c0_35, %c1_36, %c0_37, %c0_38] : memref<1x2x8x128xf32, #tpu.memory_space<vmem>>, vector<1x1x8x128xf32>
    %107 = vector.shape_cast %106 : vector<1x1x8x128xf32> to vector<8x128xf32>
    %108 = arith.addf %107, %99 : vector<8x128xf32>
    %c0_39 = arith.constant 0 : index
    %c1_40 = arith.constant 1 : index
    %c0_41 = arith.constant 0 : index
    %c0_42 = arith.constant 0 : index
    %109 = vector.load %arg5[%c0_39, %c1_40, %c0_41, %c0_42] : memref<1x2x8x128xf32, #tpu.memory_space<vmem>>, vector<1x1x8x128xf32>
    %110 = vector.shape_cast %109 : vector<1x1x8x128xf32> to vector<8x128xf32>
    %111 = vector.shape_cast %108 : vector<8x128xf32> to vector<1x1x8x128xf32>
    tpu.vector_store %arg5[%c0_39, %c1_40, %c0_41, %c0_42], %111 {strides = array<i32>} : memref<1x2x8x128xf32, #tpu.memory_space<vmem>>, vector<1x1x8x128xf32>,
    return
  }
  func.func @transform_0(%arg0: i32, %arg1: i32, %arg2: i32) -> (i32, i32, i32, i32) {
    %c1_i32 = arith.constant 1 : i32
    %0 = arith.muli %arg0, %c1_i32 : i32
    %1 = arith.addi %0, %arg2 : i32
    %c0_i32 = arith.constant 0 : i32
    %c0_i32_0 = arith.constant 0 : i32
    %c0_i32_1 = arith.constant 0 : i32
    return %arg1, %c0_i32, %1, %c0_i32_0 : i32, i32, i32, i32
  }
  func.func @transform_1(%arg0: i32, %arg1: i32, %arg2: i32) -> (i32, i32, i32) {
    %c1_i32 = arith.constant 1 : i32
    %0 = arith.muli %arg0, %c1_i32 : i32
    %1 = arith.addi %0, %arg2 : i32
    %c0_i32 = arith.constant 0 : i32
    %c0_i32_0 = arith.constant 0 : i32
    return %arg1, %1, %c0_i32 : i32, i32, i32
  }
  func.func @transform_2(%arg0: i32, %arg1: i32, %arg2: i32) -> (i32, i32, i32, i32) {
    %c0_i32 = arith.constant 0 : i32
    %c0_i32_0 = arith.constant 0 : i32
    %c0_i32_1 = arith.constant 0 : i32
    %c0_i32_2 = arith.constant 0 : i32
    return %arg0, %c0_i32, %c0_i32_0, %c0_i32_1 : i32, i32, i32, i32
  }
}

</mosaic_0001>

<llo_original>
// kernel: _forward_impl.3
$region0: #{_forward_impl.3}
  #allocation0 [shape = 'u32[]', space=smem, size = 0x4, offset = 0x4, fixed_abs, tag = 'smem constant byte address 0x4 - core index']
  #allocation1 [shape = 'u32[144,128]{1,0:T(1,128)}', space=vmem, size = 0x12000, scoped, tag = 'internal scratch']
  %s0 = inlined_call_operand.vmem [shape: f32[8,128], index: 0, kind: input, shape index: {}]
  %s1 = inlined_call_operand.vmem [shape: f32[8,128], index: 1, kind: input, shape index: {}]
  %s2 = inlined_call_operand.vmem [shape: f32[1,4,8,128], index: 2, kind: output, shape index: {}]
  %s3 = sld [smem:[#allocation0]]
  $region22: #{_forward_impl.3} parent=0
    _
  %s5 = ssub.s32 1, %s3
  %s6 = scalar_select 0, %s5, %s3
  // Predicated region
  $region2: #{_forward_impl.3} parent=0 // pred_check
    _
  $region3: #{_forward_impl.3} parent=0 // pred_check_branch
    %8 = sbr.rel (0) target = $region5
  $region4: #{_forward_impl.3} parent=0 // pred_region
    %s9 = sadd.s32 0, 0
    %p10 = scmp.lt.s32.totalorder %s9, 0
    %s11 = scalar_select %p10, %s9, 0
    %s12 = smul.addr %s11, 8
    %s13 = scalar_lea.vmem %s0, %s12
    %s14 = sadd.s32 0, 0
  $region5: #{_forward_impl.3} parent=0 // pred_fallthru
    _
  // Predicated region
  $region6: #{_forward_impl.3} parent=0 // pred_check
    _
  $region7: #{_forward_impl.3} parent=0 // pred_check_branch
    %16 = sbr.rel (0) target = $region9
  $region8: #{_forward_impl.3} parent=0 // pred_region
    %s17 = sadd.s32 0, 0
    %p18 = scmp.lt.s32.totalorder %s17, 0
    %s19 = scalar_select %p18, %s17, 0
    %s20 = smul.addr %s19, 8
    %s21 = scalar_lea.vmem %s1, %s20
    %s22 = sadd.s32 0, 0
  $region9: #{_forward_impl.3} parent=0 // pred_fallthru
    _
  %s23 = sadd.s32 0, 0
  %p24 = scmp.lt.s32.totalorder %s23, 0
  %s25 = scalar_select %p24, %s23, 0
  %s26 = smul.addr %s25, 8
  %s27 = scalar_lea.vmem %s0, %s26
  %s28 = sadd.s32 0, 0
  %p29 = scmp.lt.s32.totalorder %s28, 0
  %s30 = scalar_select %p29, %s28, 0
  %s31 = smul.addr %s30, 8
  %s32 = scalar_lea.vmem %s1, %s31
  %s33 = sadd.s32 0, 0
  %p34 = scmp.lt.s32.totalorder %s33, 0
  %s35 = scalar_select %p34, %s33, 0
  %s36 = smul.addr %s35, 8
  %s37 = scalar_lea.vmem %s0, %s36
  %s38 = sadd.s32 0, 0
  %s39 = sadd.s32 0, 0
  %p40 = scmp.lt.s32.totalorder %s39, 0
  %s41 = scalar_select %p40, %s39, 0
  %s42 = smul.addr %s41, 8
  %s43 = scalar_lea.vmem %s1, %s42
  %s44 = sadd.s32 0, 0
  %p45 = scmp.eq.s32.totalorder 0, 0
  // Predicated region
  $region10: #{_forward_impl.3} parent=0 // pred_check
    %p46 = pneg %p45
  $region11: #{_forward_impl.3} parent=0 // pred_check_branch
    %48 = sbr.rel (%p46) target = $region13
  $region12: #{_forward_impl.3} parent=0 // pred_region
    %49 = vst [vmem:[%s2] sm:$0xff] 0.0
    %50 = vst [vmem:[%s2 + $0x8] sm:$0xff] 0.0
    %51 = vst [vmem:[%s2 + $0x10] sm:$0xff] 0.0
    %52 = vst [vmem:[%s2 + $0x18] sm:$0xff] 0.0
  $region13: #{_forward_impl.3} parent=0 // pred_fallthru
    _
  %s53 = sadd.s32 0, 0
  %s54 = smul.u32 %s53, 8
  %v55 = vlaneseq
  %v56 = vshrl.u32 %v55, 7
  %v57 = vmul.u32 %v56, 128
  %v58 = vlaneseq
  %v59 = vand.u32 %v58, 127
  %v60 = vadd.s32 %v57, %v59
  %s61 = sadd.s32 %s54, 0
  %s62 = smul.u32 %s61, 128
  %s63 = ssub.s32 512, %s62
  %v64 = vstv %s63
  %vm65 = vcmp.lt.s32.totalorder %v60, %v64
  %v66 = vld [vmem:[%s37] sm:$0xff]
  %v67 = vld [vmem:[%s43] sm:$0xff]
  %v68 = vand.u32 2147483647, %v66
  %v69 = vsub.f32 0.0, %v68
  %v70 = vmul.f32 %v69, 1.442695
  %v71 = vpow.pop %v70
  %v72 = vmax.f32 %v66, 0.0
  %v73 = vmul.f32 %v66, %v67
  %v74 = vsub.f32 %v72, %v73
  %v75 = vadd.f32 %v71, 1.0
  %v76 = vlog2.pop %v75
  %v77 = vmul.f32 %v76, 0.6931472
  %v78 = vmul.f32 -0.5, %v71
  %v79 = vadd.f32 %v78, 1.0
  %v80 = vmul.f32 %v79, %v71
  %v81 = vand.u32 2147483647, %v71
  %vm82 = vcmp.lt.f32.partialorder %v81, 0.0004427343
  %v83 = vsel %vm82, %v80, %v77
  %v84 = vadd.f32 %v74, %v83
  %v85 = vadd.f32 %v71, 1.0
  %v86 = vrcp.pop %v85
  %v87 = vmul.f32 %v85, %v86
  %v88 = vsub.f32 2.0, %v87
  %v89 = vmul.f32 %v86, %v88
  %vm90 = vcmp.ge.f32.partialorder %v66, 0.0
  %v91 = vmul.f32 %v71, %v89
  %v92 = vsel %vm90, %v89, %v91
  %v93 = vsel %vm65, %v84, 0.0
  %v94 = vadd.f32 %v93, 0.0
  %v95 = vmul.f32 %v92, %v67
  %v96 = vsel %vm65, %v95, 0.0
  %v97 = vadd.f32 %v96, 0.0
  %v98 = vsel %vm65, %v92, 0.0
  %v99 = vadd.f32 %v98, 0.0
  %v100 = vsel %vm65, %v67, 0.0
  %v101 = vadd.f32 %v100, 0.0
  %v102 = vld [vmem:[%s2] sm:$0xff]
  %v103 = vadd.f32 %v102, %v94
  %104 = vst [vmem:[%s2] sm:$0xff] %v103
  %s105 = scalar_lea.vmem %s2, 8
  %v106 = vld [vmem:[%s105] sm:$0xff]
  %v107 = vadd.f32 %v106, %v97
  %108 = vst [vmem:[%s105] sm:$0xff] %v107
  %s109 = scalar_lea.vmem %s2, 16
  %v110 = vld [vmem:[%s109] sm:$0xff]
  %v111 = vadd.f32 %v110, %v99
  %112 = vst [vmem:[%s109] sm:$0xff] %v111
  %s113 = scalar_lea.vmem %s2, 24
  %v114 = vld [vmem:[%s113] sm:$0xff]
  %v115 = vadd.f32 %v114, %v101
  %116 = vst [vmem:[%s113] sm:$0xff] %v115
  // Predicated region
  $region14: #{_forward_impl.3} parent=0 // pred_check
    _
  $region15: #{_forward_impl.3} parent=0 // pred_check_branch
    %118 = sbr.rel (0) target = $region17
  $region16: #{_forward_impl.3} parent=0 // pred_region
    _
  $region17: #{_forward_impl.3} parent=0 // pred_fallthru
    _
  // Predicated region
  $region18: #{_forward_impl.3} parent=0 // pred_check
    _
  $region19: #{_forward_impl.3} parent=0 // pred_check_branch
    %120 = sbr.rel (0) target = $region21
  $region20: #{_forward_impl.3} parent=0 // pred_region
    _
  $region21: #{_forward_impl.3} parent=0 // pred_fallthru
    _

// kernel: _forward_impl.2
$region0: #{_forward_impl.2}
  #allocation0 [shape = 'u32[]', space=smem, size = 0x4, offset = 0x4, fixed_abs, tag = 'smem constant byte address 0x4 - core index']
  #allocation1 [shape = 'u32[144,128]{1,0:T(1,128)}', space=vmem, size = 0x12000, scoped, tag = 'internal scratch']
  %s0 = inlined_call_operand.vmem [shape: f32[2,4,8,128], index: 0, kind: input, shape index: {}]
  %s1 = inlined_call_operand.vmem [shape: s32[2,8,128], index: 1, kind: input, shape index: {}]
  %s2 = inlined_call_operand.vmem [shape: f32[1,2,8,128], index: 2, kind: output, shape index: {}]
  %s3 = sld [smem:[#allocation0]]
  $region45: #{_forward_impl.2} parent=0
    _
  %s5 = ssub.s32 1, %s3
  %s6 = scalar_select 0, %s5, %s3
  loop: start=0, step=1, limit=4
  $region2: #{_forward_impl.2} parent=0 // loop_pre_header
    _
  $region3: #{_forward_impl.2} parent=0 // loop_header
    %s8 = sphi 0, %s12
    %p9 = scmp.ge.s32.totalorder %s8, 4
    %s15 = sphi 0, %s34
    %s16 = sphi 0, %s30
    %s17 = sphi 0, %s26
    %s18 = sphi 0, %s15
    %s19 = sphi 0, %s16
    %s20 = sphi 0, %s17
    %s21 = sphi 0, %s18
    %s22 = sphi 0, %s19
    %s23 = sphi 0, %s20
    %s41 = sphi 0, %s43
    %s44 = sphi 0, %s41
    %s45 = sphi 0, %s44
    %s61 = sphi 0, %s45
    %s71 = sphi 0, %s73
    %s74 = sphi 0, %s71
    %s75 = sphi 0, %s74
    %s91 = sphi 0, %s75
    %s97 = sphi 0, %s99
    %s100 = sphi 0, %s97
    %s101 = sphi 0, %s100
    %s117 = sphi 0, %s101
  $region4: #{_forward_impl.2} parent=0 // loop_header_branch
    %11 = sbr.rel (%p9) target = $region8
  $region5: #{_forward_impl.2} parent=0 // loop_body
    %s13 = ssub.s32 %s8, 1
    %s14 = ssub.s32 %s8, 2
    %s24 = sadd.s32 1, %s17
    %p25 = scmp.ge.s32.totalorder %s24, 1
    %s26 = scalar_select %p25, 0, %s24
    %s27 = sadd.s32 1, %s16
    %s28 = scalar_select %p25, %s27, %s16
    %p29 = scmp.ge.s32.totalorder %s28, 2
    %s30 = scalar_select %p29, 0, %s28
    %s31 = sadd.s32 1, %s15
    %s32 = scalar_select %p29, %s31, %s15
    %p33 = scmp.ge.s32.totalorder %s32, 1
    %s34 = scalar_select %p33, 0, %s32
    %s35 = sadd.s32 %s15, %s17
    %s36 = sadd.s32 %s34, %s26
    %s37 = ssub.s32 %s16, %s30
    %s38 = ssub.s32 %s35, %s36
    %s39 = sor.u32 %s37, %s38
    %p40 = scmp.eq.s32.totalorder %s39, 0
    %s42 = sadd.s32 %s41, 1
    %s43 = scalar_select %p40, %s41, %s42
    %p46 = pneg %p40
    %p47 = scmp.eq.s32.totalorder %s8, 1
    %p48 = por %p46, %p47
    %p49 = scmp.ne.s32.totalorder %s41, %s44
    %p50 = scmp.eq.s32.totalorder %s8, 0
    %p51 = por %p49, %p50
    %p52 = scmp.ne.s32.totalorder %s41, %s44
    %p53 = scmp.eq.s32.totalorder %s13, 1
    %p54 = por %p52, %p53
    %p55 = scmp.ne.s32.totalorder %s44, %s45
    %p56 = scmp.eq.s32.totalorder %s13, 0
    %p57 = por %p55, %p56
    %p58 = scmp.ne.s32.totalorder %s44, %s45
    %p59 = scmp.eq.s32.totalorder %s14, 1
    %p60 = por %p58, %p59
    %p62 = scmp.ne.s32.totalorder %s45, %s61
    %p63 = scmp.eq.s32.totalorder %s14, 0
    %p64 = por %p62, %p63
    %s65 = sadd.s32 %s15, %s17
    %s66 = sadd.s32 %s34, %s26
    %s67 = ssub.s32 %s16, %s30
    %s68 = ssub.s32 %s65, %s66
    %s69 = sor.u32 %s67, %s68
    %p70 = scmp.eq.s32.totalorder %s69, 0
    %s72 = sadd.s32 %s71, 1
    %s73 = scalar_select %p70, %s71, %s72
    %p76 = pneg %p70
    %p77 = scmp.eq.s32.totalorder %s8, 1
    %p78 = por %p76, %p77
    %p79 = scmp.ne.s32.totalorder %s71, %s74
    %p80 = scmp.eq.s32.totalorder %s8, 0
    %p81 = por %p79, %p80
    %p82 = scmp.ne.s32.totalorder %s71, %s74
    %p83 = scmp.eq.s32.totalorder %s13, 1
    %p84 = por %p82, %p83
    %p85 = scmp.ne.s32.totalorder %s74, %s75
    %p86 = scmp.eq.s32.totalorder %s13, 0
    %p87 = por %p85, %p86
    %p88 = scmp.ne.s32.totalorder %s74, %s75
    %p89 = scmp.eq.s32.totalorder %s14, 1
    %p90 = por %p88, %p89
    %p92 = scmp.ne.s32.totalorder %s75, %s91
    %p93 = scmp.eq.s32.totalorder %s14, 0
    %p94 = por %p92, %p93
    %s95 = ssub.s32 %s15, %s34
    %p96 = scmp.eq.s32.totalorder %s95, 0
    %s98 = sadd.s32 %s97, 1
    %s99 = scalar_select %p96, %s97, %s98
    %p102 = pneg %p96
    %p103 = scmp.eq.s32.totalorder %s8, 1
    %p104 = por %p102, %p103
    %p105 = scmp.ne.s32.totalorder %s97, %s100
    %p106 = scmp.eq.s32.totalorder %s8, 0
    %p107 = por %p105, %p106
    %p108 = scmp.ne.s32.totalorder %s97, %s100
    %p109 = scmp.eq.s32.totalorder %s13, 1
    %p110 = por %p108, %p109
    %p111 = scmp.ne.s32.totalorder %s100, %s101
    %p112 = scmp.eq.s32.totalorder %s13, 0
    %p113 = por %p111, %p112
    %p114 = scmp.ne.s32.totalorder %s100, %s101
    %p115 = scmp.eq.s32.totalorder %s14, 1
    %p116 = por %p114, %p115
    %p118 = scmp.ne.s32.totalorder %s101, %s117
    %p119 = scmp.eq.s32.totalorder %s14, 0
    %p120 = por %p118, %p119
    %p121 = scmp.le.s32.totalorder 1, %s8
    %p122 = scmp.lt.s32.totalorder %s8, 3
    %p123 = pnand %p121, %p122
    %p124 = pneg %p123
    // Predicated region
    $region9: #{_forward_impl.2} parent=5 // pred_check
      _
    $region10: #{_forward_impl.2} parent=5 // pred_check_branch
      %126 = sbr.rel (%p123) target = $region12
    $region11: #{_forward_impl.2} parent=5 // pred_region
      %s127 = ssub.s32 %s8, 1
    $region12: #{_forward_impl.2} parent=5 // pred_fallthru
      _
    %p128 = scmp.lt.s32.totalorder %s8, 2
    // Predicated region
    $region13: #{_forward_impl.2} parent=5 // pred_check
      %p129 = pneg %p128
    $region14: #{_forward_impl.2} parent=5 // pred_check_branch
      %131 = sbr.rel (%p129) target = $region16
    $region15: #{_forward_impl.2} parent=5 // pred_region
      // Predicated region
      $region17: #{_forward_impl.2} parent=15 // pred_check
        %p132 = pneg %p51
      $region18: #{_forward_impl.2} parent=15 // pred_check_branch
        %134 = sbr.rel (%p132) target = $region20
      $region19: #{_forward_impl.2} parent=15 // pred_region
        %s135 = sadd.s32 %s15, %s17
        %p136 = scmp.lt.s32.totalorder %s16, 1
        %s137 = scalar_select %p136, %s16, 1
        %p138 = scmp.lt.s32.totalorder %s135, 0
        %s139 = scalar_select %p138, %s135, 0
        %s140 = smul.addr %s137, 4
        %s141 = sadd.s32 %s139, %s140
        %s142 = smul.addr %s141, 8
        %s143 = scalar_lea.vmem %s0, %s142
        %s144 = sadd.s32 %s15, %s17
      $region20: #{_forward_impl.2} parent=15 // pred_fallthru
        _
      // Predicated region
      $region21: #{_forward_impl.2} parent=15 // pred_check
        %p145 = pneg %p81
      $region22: #{_forward_impl.2} parent=15 // pred_check_branch
        %147 = sbr.rel (%p145) target = $region24
      $region23: #{_forward_impl.2} parent=15 // pred_region
        %s148 = sadd.s32 %s15, %s17
        %p149 = scmp.lt.s32.totalorder %s16, 1
        %s150 = scalar_select %p149, %s16, 1
        %p151 = scmp.lt.s32.totalorder %s148, 0
        %s152 = scalar_select %p151, %s148, 0
        %s153 = sadd.s32 %s152, %s150
        %s154 = smul.addr %s153, 8
        %s155 = scalar_lea.vmem %s1, %s154
        %s156 = sadd.s32 %s15, %s17
      $region24: #{_forward_impl.2} parent=15 // pred_fallthru
        _
    $region16: #{_forward_impl.2} parent=5 // pred_fallthru
      _
    %p157 = scmp.le.s32.totalorder 1, %s8
    %p158 = scmp.lt.s32.totalorder %s8, 3
    %p159 = pnand %p157, %p158
    %p160 = pneg %p159
    // Predicated region
    $region25: #{_forward_impl.2} parent=5 // pred_check
      _
    $region26: #{_forward_impl.2} parent=5 // pred_check_branch
      %162 = sbr.rel (%p159) target = $region28
    $region27: #{_forward_impl.2} parent=5 // pred_region
      %s163 = ssub.s32 %s8, 1
      %s164 = sadd.s32 %s18, %s20
      %p165 = scmp.lt.s32.totalorder %s19, 1
      %s166 = scalar_select %p165, %s19, 1
      %p167 = scmp.lt.s32.totalorder %s164, 0
      %s168 = scalar_select %p167, %s164, 0
      %s169 = smul.addr %s166, 4
      %s170 = sadd.s32 %s168, %s169
      %s171 = smul.addr %s170, 8
      %s172 = scalar_lea.vmem %s0, %s171
      %p173 = pneg %p57
      %p174 = pneg %p54
      %s175 = sadd.s32 %s18, %s20
      %p176 = scmp.lt.s32.totalorder %s19, 1
      %s177 = scalar_select %p176, %s19, 1
      %p178 = scmp.lt.s32.totalorder %s175, 0
      %s179 = scalar_select %p178, %s175, 0
      %s180 = sadd.s32 %s179, %s177
      %s181 = smul.addr %s180, 8
      %s182 = scalar_lea.vmem %s1, %s181
      %p183 = pneg %p87
      %p184 = pneg %p84
      %p185 = pneg %p113
      %p186 = pneg %p110
      %p187 = scmp.lt.s32.totalorder %s18, 0
      %s188 = scalar_select %p187, %s18, 0
      %s189 = smul.addr %s188, 2
      %s190 = smul.addr %s189, 8
      %s191 = scalar_lea.vmem %s2, %s190
      %s192 = sadd.s32 %s18, %s20
      %p193 = scmp.lt.s32.totalorder %s19, 1
      %s194 = scalar_select %p193, %s19, 1
      %p195 = scmp.lt.s32.totalorder %s192, 0
      %s196 = scalar_select %p195, %s192, 0
      %s197 = smul.addr %s194, 4
      %s198 = sadd.s32 %s196, %s197
      %s199 = smul.addr %s198, 8
      %s200 = scalar_lea.vmem %s0, %s199
      %s201 = sadd.s32 %s18, %s20
      %s202 = sadd.s32 %s18, %s20
      %p203 = scmp.lt.s32.totalorder %s19, 1
      %s204 = scalar_select %p203, %s19, 1
      %p205 = scmp.lt.s32.totalorder %s202, 0
      %s206 = scalar_select %p205, %s202, 0
      %s207 = sadd.s32 %s206, %s204
      %s208 = smul.addr %s207, 8
      %s209 = scalar_lea.vmem %s1, %s208
      %s210 = sadd.s32 %s18, %s20
      %p211 = scmp.lt.s32.totalorder %s18, 0
      %s212 = scalar_select %p211, %s18, 0
      %s213 = smul.addr %s212, 2
      %s214 = smul.addr %s213, 8
      %s215 = scalar_lea.vmem %s2, %s214
      %p216 = scmp.eq.s32.totalorder %s19, 0
      %p217 = scmp.eq.s32.totalorder %s20, 0
      %p218 = pnand %p216, %p217
      %p219 = pneg %p218
      // Predicated region
      $region29: #{_forward_impl.2} parent=27 // pred_check
        _
      $region30: #{_forward_impl.2} parent=27 // pred_check_branch
        %221 = sbr.rel (%p218) target = $region32
      $region31: #{_forward_impl.2} parent=27 // pred_region
        %222 = vst [vmem:[%s215] sm:$0xff] 0.0
        %223 = vst [vmem:[%s215 + $0x8] sm:$0xff] 0.0
      $region32: #{_forward_impl.2} parent=27 // pred_fallthru
        _
      %s224 = sadd.s32 %s18, %s20
      %s225 = smul.u32 %s224, 8
      %v226 = vlaneseq
      %v227 = vshrl.u32 %v226, 7
      %v228 = vmul.u32 %v227, 128
      %v229 = vlaneseq
      %v230 = vand.u32 %v229, 127
      %v231 = vadd.s32 %v228, %v230
      %s232 = sadd.s32 %s225, 0
      %s233 = smul.u32 %s232, 128
      %s234 = ssub.s32 256, %s233
      %v235 = vstv %s234
      %vm236 = vcmp.lt.s32.totalorder %v231, %v235
      %v237 = vld [vmem:[%s209] sm:$0xff]
      %v238 = vld [vmem:[%s200] sm:$0xff]
      %s239 = sadd.s32 0, 8
      %s240 = scalar_lea.vmem %s200, %s239
      %v241 = vld [vmem:[%s240] sm:$0xff]
      %s242 = sadd.s32 0, 16
      %s243 = scalar_lea.vmem %s200, %s242
      %v244 = vld [vmem:[%s243] sm:$0xff]
      %s245 = sadd.s32 0, 24
      %s246 = scalar_lea.vmem %s200, %s245
      %v247 = vld [vmem:[%s246] sm:$0xff]
      %v248 = vmax.f32 %v238, %v241
      %v249 = vmax.f32 %v248, %v244
      %v250 = vmax.f32 %v249, %v247
      %v251 = vsub.f32 %v238, %v250
      %v252 = vmul.f32 %v251, 1.442695
      %v253 = vpow.pop %v252
      %v254 = vadd.f32 %v253, 0.0
      %vm255 = vcmp.eq.s32.totalorder %v237, 0
      %v256 = vsel %vm255, 1, 0
      %v257 = vcvt.s32.f32 %v256
      %v258 = vmul.f32 %v257, %v238
      %v259 = vadd.f32 %v258, 0.0
      %v260 = vadd.f32 %v257, 0.0
      %v261 = vsub.f32 %v241, %v250
      %v262 = vmul.f32 %v261, 1.442695
      %v263 = vpow.pop %v262
      %v264 = vadd.f32 %v254, %v263
      %vm265 = vcmp.eq.s32.totalorder %v237, 1
      %v266 = vsel %vm265, 1, 0
      %v267 = vcvt.s32.f32 %v266
      %v268 = vmul.f32 %v267, %v241
      %v269 = vadd.f32 %v259, %v268
      %v270 = vadd.f32 %v260, %v267
      %v271 = vsub.f32 %v244, %v250
      %v272 = vmul.f32 %v271, 1.442695
      %v273 = vpow.pop %v272
      %v274 = vadd.f32 %v264, %v273
      %vm275 = vcmp.eq.s32.totalorder %v237, 2
      %v276 = vsel %vm275, 1, 0
      %v277 = vcvt.s32.f32 %v276
      %v278 = vmul.f32 %v277, %v244
      %v279 = vadd.f32 %v269, %v278
      %v280 = vmul.f32 %v277, 3.0
      %v281 = vadd.f32 %v270, %v280
      %v282 = vsub.f32 %v247, %v250
      %v283 = vmul.f32 %v282, 1.442695
      %v284 = vpow.pop %v283
      %v285 = vadd.f32 %v274, %v284
      %vm286 = vcmp.eq.s32.totalorder %v237, 3
      %v287 = vsel %vm286, 1, 0
      %v288 = vcvt.s32.f32 %v287
      %v289 = vmul.f32 %v288, %v247
      %v290 = vadd.f32 %v279, %v289
      %v291 = vmul.f32 %v288, 5.0
      %v292 = vadd.f32 %v281, %v291
      %v293 = vlog2.pop %v285
      %v294 = vmul.f32 %v293, 0.6931472
      %v295 = vadd.f32 %v250, %v294
      %v296 = vsub.f32 %v295, %v290
      %v297 = vmul.f32 %v292, %v296
      %v298 = vsel %vm236, %v297, 0.0
      %v299 = vadd.f32 %v298, 0.0
      %v300 = vsel %vm236, %v292, 0.0
      %v301 = vadd.f32 %v300, 0.0
      %v302 = vld [vmem:[%s215] sm:$0xff]
      %v303 = vadd.f32 %v302, %v299
      %304 = vst [vmem:[%s215] sm:$0xff] %v303
      %s305 = scalar_lea.vmem %s215, 8
      %v306 = vld [vmem:[%s305] sm:$0xff]
      %v307 = vadd.f32 %v306, %v301
      %308 = vst [vmem:[%s305] sm:$0xff] %v307
      %p309 = scmp.lt.s32.totalorder %s18, 0
      %s310 = scalar_select %p309, %s18, 0
      %s311 = smul.addr %s310, 2
      %s312 = smul.addr %s311, 8
      %s313 = scalar_lea.vmem %s2, %s312
      // Predicated region
      $region33: #{_forward_impl.2} parent=27 // pred_check
        %p314 = pneg %p110
      $region34: #{_forward_impl.2} parent=27 // pred_check_branch
        %316 = sbr.rel (%p314) target = $region36
      $region35: #{_forward_impl.2} parent=27 // pred_region
        _
      $region36: #{_forward_impl.2} parent=27 // pred_fallthru
        _
      // Predicated region
      $region37: #{_forward_impl.2} parent=27 // pred_check
        %p317 = pneg %p110
      $region38: #{_forward_impl.2} parent=27 // pred_check_branch
        %319 = sbr.rel (%p317) target = $region40
      $region39: #{_forward_impl.2} parent=27 // pred_region
        %p320 = scmp.lt.s32.totalorder %s18, 0
        %s321 = scalar_select %p320, %s18, 0
        %s322 = smul.addr %s321, 2
        %s323 = smul.addr %s322, 8
        %s324 = scalar_lea.vmem %s2, %s323
      $region40: #{_forward_impl.2} parent=27 // pred_fallthru
        _
    $region28: #{_forward_impl.2} parent=5 // pred_fallthru
      _
    %p325 = scmp.le.s32.totalorder 2, %s8
    // Predicated region
    $region41: #{_forward_impl.2} parent=5 // pred_check
      %p326 = pneg %p325
    $region42: #{_forward_impl.2} parent=5 // pred_check_branch
      %328 = sbr.rel (%p326) target = $region44
    $region43: #{_forward_impl.2} parent=5 // pred_region
      %s329 = ssub.s32 %s8, 2
    $region44: #{_forward_impl.2} parent=5 // pred_fallthru
      _
  $region6: #{_forward_impl.2} parent=0 // loop_footer
    %s12 = sadd.s32 1, %s8
  $region7: #{_forward_impl.2} parent=0 // loop_footer_branch
    %7 = sbr.rel target = $region3
  $region8: #{_forward_impl.2} parent=0 // loop_exit
    _

</llo_original>
